<compile_context>
chip_gen: v7x
topology: tpu7x:2x2x1
jax: 0.10.0
libtpu: 0.0.40
codegen_flags: <defaults>
</compile_context>

<pallas_src>
import numpy as np
import jax
import jax.numpy as jnp
from jax import lax
from jax.experimental import pallas as pl
from jax.experimental.pallas import tpu as pltpu

EPS = 1e-5


# --------------------------------------------------------------------------
# Host-side, parameter-only precompute (runs once, outside the jitted path).
# --------------------------------------------------------------------------
def _packed_band_weights(w, W, pack):
    """Fold kernel-height taps (in packed-row units), row position within the
    pack, the 3 width taps, and the zero padding of a 3x3 HWIO conv weight into
    3 banded matrices over the packed lane layout, stacked along K so each conv
    is a single im2col matmul.

    w: (3, 3, Cin, Cout) -> (3*pack*W*Cin, pack*W*Cout)
    Lane layout: lane = p*W*C + w*C + c   (p = row position within the pack).
    """
    w = np.asarray(w, np.float32)
    kh, kw, Cin, Cout = w.shape
    Lin, Lout = pack * W * Cin, pack * W * Cout
    B = np.zeros((3, Lin, Lout), np.float32)
    for ti, t in enumerate((-1, 0, 1)):            # packed-row tap
        for p_in in range(pack):
            for p_out in range(pack):
                dy = pack * t + p_in - p_out + 1   # kernel height tap
                if not (0 <= dy < kh):
                    continue
                for w_in in range(W):
                    for w_out in range(W):
                        dx = w_in - w_out + 1      # kernel width tap
                        if not (0 <= dx < kw):
                            continue
                        r0 = (p_in * W + w_in) * Cin
                        c0 = (p_out * W + w_out) * Cout
                        B[ti, r0:r0 + Cin, c0:c0 + Cout] = w[dy, dx]
    return B.reshape(3 * Lin, Lout)


def _choose_pack(H, W, C):
    pack = 1
    while W * C * pack < 128 and H % (2 * pack) == 0:
        pack *= 2
    return pack


def prepare_params(params, N, C, H, W):
    """Precompute banded weights, Qn and lane-tiled gamma/beta (host side)."""
    w1, g1, b1, w2, g2, b2 = params
    planes = np.asarray(w1).shape[-1]
    assert C == planes, "identity residual requires inplanes == planes"
    pack = _choose_pack(H, W, C)
    assert H % pack == 0
    Lp = pack * W * C

    B1 = jnp.asarray(_packed_band_weights(w1, W, pack), jnp.bfloat16)
    B2 = jnp.asarray(_packed_band_weights(w2, W, pack), jnp.bfloat16)

    # Per-channel averaging matrix in the packed lane layout:
    # (rowsum @ Qn)[j] = mean over all (n, h, w) of the channel of lane j.
    lane_ch = np.arange(Lp) % C
    Qn = jnp.asarray((lane_ch[:, None] == lane_ch[None, :]).astype(np.float32)
                     / float(N * H * W))

    def lane_tile(v):
        return jnp.tile(jnp.asarray(v, jnp.float32).reshape(1, C), (1, pack * W))

    return dict(pack=pack, Lp=Lp, B1=B1, B2=B2, Qn=Qn,
                g1=lane_tile(g1), b1=lane_tile(b1),
                g2=lane_tile(g2), b2=lane_tile(b2))


# --------------------------------------------------------------------------
# Fused kernel.
# --------------------------------------------------------------------------
def _make_kernel(N, R, Lp):
    M = N * R

    def conv(p_ref, bw_ref):
        # p_ref: (N, R+2, Lp) f32 padded activation; bw_ref: (3*Lp, Lp) bf16.
        # Single fat im2col matmul (three row-shifted slices concatenated on K).
        slab = jnp.concatenate(
            [p_ref[:, 0:R, :].astype(jnp.bfloat16),
             p_ref[:, 1:R + 1, :].astype(jnp.bfloat16),
             p_ref[:, 2:R + 2, :].astype(jnp.bfloat16)],
            axis=-1).reshape(M, 3 * Lp)
        return jnp.dot(slab, bw_ref[...], preferred_element_type=jnp.float32)

    def bn(acc, qn, gamma_l, beta_l):
        # Training-mode batch statistics (biased variance), one-pass, f32.
        # Stats for mean and mean-of-squares share ONE matmul against Qn.
        # TODO(synk): one-pass E[x^2]-E[x]^2 can cancel when |mean| >> std;
        #   switch to a shifted / two-pass variance if activations drift.
        s = jnp.sum(acc, axis=0, keepdims=True)           # (1, Lp)
        sq = jnp.sum(acc * acc, axis=0, keepdims=True)    # (1, Lp)
        stats = jnp.dot(jnp.concatenate([s, sq], axis=0), qn,
                        preferred_element_type=jnp.float32)   # (2, Lp)
        mean = stats[0:1, :]
        var = jnp.maximum(stats[1:2, :] - mean * mean, 0.0)
        scale = gamma_l * lax.rsqrt(var + EPS)
        shift = beta_l - mean * scale
        return acc * scale + shift

    def kernel(x_ref, b1_ref, b2_ref, g1_ref, be1_ref, g2_ref, be2_ref,
               qn_ref, o_ref, p1, p2):
        halo = jnp.zeros((N, 1, Lp), jnp.float32)
        x3 = x_ref[...]                                    # (N, R, Lp) f32
        qn = qn_ref[...]

        # conv1 -> bn1 -> relu  (intermediate never leaves VMEM)
        p1[:, 0:1, :] = halo
        p1[:, R + 1:R + 2, :] = halo
        p1[:, 1:R + 1, :] = x3
        a1 = conv(p1, b1_ref)                              # (M, Lp) f32
        o1 = jnp.maximum(bn(a1, qn, g1_ref[...], be1_ref[...]), 0.0)

        # conv2 -> bn2 -> + identity residual -> relu
        p2[:, 0:1, :] = halo
        p2[:, R + 1:R + 2, :] = halo
        p2[:, 1:R + 1, :] = o1.reshape(N, R, Lp)
        a2 = conv(p2, b2_ref)
        o2 = bn(a2, qn, g2_ref[...], be2_ref[...]) + x3.reshape(M, Lp)
        o_ref[...] = jnp.maximum(o2, 0.0).reshape(N, R, Lp)

    return kernel


# --------------------------------------------------------------------------
# Jitted forward in the packed lane-dense layout (N, H/pack, pack*W*C).
# --------------------------------------------------------------------------
@jax.jit
def basic_block_forward_lane(x_lane, B1, B2, g1, b1, g2, b2, Qn):
    N, R, Lp = x_lane.shape
    x_lane = x_lane.astype(jnp.float32)

    # VMEM footprint (f32 activations + bf16 weights), with headroom.
    acts = 2 * N * R * Lp * 4                      # x in + out
    pads = 2 * N * (R + 2) * Lp * 4                # padded scratch (f32)
    wts = 2 * (3 * Lp) * Lp * 2 + Lp * Lp * 4      # B1, B2 (bf16) + Qn (f32)
    slabs = 4 * N * R * 3 * Lp * 4                 # im2col slabs / accumulators
    vmem_limit = int(min(64 << 20, max(16 << 20, 4 * (acts + pads + wts + slabs))))

    vmem = pl.BlockSpec(memory_space=pltpu.MemorySpace.VMEM)
    return pl.pallas_call(
        _make_kernel(N, R, Lp),
        out_shape=jax.ShapeDtypeStruct((N, R, Lp), jnp.float32),
        in_specs=[vmem] * 8,
        out_specs=vmem,
        scratch_shapes=[pltpu.VMEM((N, R + 2, Lp), jnp.float32),
                        pltpu.VMEM((N, R + 2, Lp), jnp.float32)],
        compiler_params=pltpu.CompilerParams(vmem_limit_bytes=vmem_limit),
    )(x_lane, B1, B2, g1, b1, g2, b2, Qn)


# NCHW convenience wrapper (layout conversion kept OUT of the per-block hot path;
# chained blocks should stay in the packed lane layout and skip these transposes).
def basic_block_forward(x_nchw, prep):
    N, C, H, W = x_nchw.shape
    pack = prep["pack"]
    x_lane = jnp.transpose(x_nchw.astype(jnp.float32),
                           (0, 2, 3, 1)).reshape(N, H // pack, pack * W * C)
    y_lane = basic_block_forward_lane(x_lane, prep["B1"], prep["B2"],
                                      prep["g1"], prep["b1"],
                                      prep["g2"], prep["b2"], prep["Qn"])
    return jnp.transpose(y_lane.reshape(N, H, W, C), (0, 3, 1, 2))


# --------------------------------------------------------------------------
# Pure-JAX reference (f32, matches PyTorch BasicBlock in train-mode BN).
# --------------------------------------------------------------------------
def basic_block_reference(x_nchw, params):
    w1, g1, b1, w2, g2, b2 = params
    x = jnp.transpose(x_nchw, (0, 2, 3, 1)).astype(jnp.float32)

    def conv(v, w):
        return lax.conv_general_dilated(
            v, w, (1, 1), "SAME",
            dimension_numbers=("NHWC", "HWIO", "NHWC"))

    def bn(v, g, b):
        m = v.mean(axis=(0, 1, 2), keepdims=True)
        var = ((v - m) ** 2).mean(axis=(0, 1, 2), keepdims=True)
        return (v - m) / jnp.sqrt(var + EPS) * g.reshape(1, 1, 1, -1) \
            + b.reshape(1, 1, 1, -1)

    o = jax.nn.relu(bn(conv(x, w1), g1, b1))
    o = bn(conv(o, w2), g2, b2) + x
    o = jax.nn.relu(o)
    return jnp.transpose(o, (0, 3, 1, 2))


if __name__ == "__main__":
    key = jax.random.PRNGKey(0)
    N, C, H, W = 2, 4, 16, 16          # inplanes = planes = 4, stride = 1
    planes = 4
    k1, k2, k3, k4, k5 = jax.random.split(key, 5)

    x = jax.random.normal(k1, (N, C, H, W), jnp.float32)
    # Deterministic synthetic parameters (conv weights HWIO, bias-free convs).
    w1 = 0.1 * jax.random.normal(k2, (3, 3, C, planes), jnp.float32)
    w2 = 0.1 * jax.random.normal(k3, (3, 3, planes, planes), jnp.float32)
    g1 = 1.0 + 0.1 * jax.random.normal(k4, (1, planes), jnp.float32)
    b1 = 0.1 * jax.random.normal(k5, (1, planes), jnp.float32)
    g2 = jnp.ones((1, planes), jnp.float32)   # default BatchNorm2d affine init
    b2 = jnp.zeros((1, planes), jnp.float32)
    params = (w1, g1, b1, w2, g2, b2)

    prep = prepare_params(params, N, C, H, W)   # host-side, once per parameter set
    out = basic_block_forward(x, prep)
    jax.block_until_ready(out)

    ref = basic_block_reference(x, params)
    # bf16 MXU operands (f32 accumulation) -> loosened tolerance vs f32 reference.
    np.testing.assert_allclose(np.asarray(out), np.asarray(ref),
                               rtol=3e-2, atol=3e-2)

    print("KERNEL_OK")
</pallas_src>

<mosaic_0001>
module attributes {stable_mosaic.version = 11 : i64} {
  func.func @kernel(%arg0: memref<2x8x128xf32, #tpu.memory_space<vmem>>, %arg1: memref<384x128xbf16, #tpu.memory_space<vmem>>, %arg2: memref<384x128xbf16, #tpu.memory_space<vmem>>, %arg3: memref<1x128xf32, #tpu.memory_space<vmem>>, %arg4: memref<1x128xf32, #tpu.memory_space<vmem>>, %arg5: memref<1x128xf32, #tpu.memory_space<vmem>>, %arg6: memref<1x128xf32, #tpu.memory_space<vmem>>, %arg7: memref<128x128xf32, #tpu.memory_space<vmem>>, %arg8: memref<2x8x128xf32, #tpu.memory_space<vmem>>, %arg9: memref<2x10x128xf32, #tpu.memory_space<vmem>>, %arg10: memref<2x10x128xf32, #tpu.memory_space<vmem>>) attributes {dimension_semantics = [], scalar_prefetch = 0 : i64, scratch_operands = 2 : i64, tpu.core_type = #tpu.core_type<tc>} {
    %cst = arith.constant 0.000000e+00 : f32
    %0 = vector.broadcast %cst : f32 to vector<2x1x128xf32>
    %c0 = arith.constant 0 : index
    %c0_0 = arith.constant 0 : index
    %c0_1 = arith.constant 0 : index
    %1 = vector.load %arg0[%c0, %c0_0, %c0_1] : memref<2x8x128xf32, #tpu.memory_space<vmem>>, vector<2x8x128xf32>
    %c0_2 = arith.constant 0 : index
    %c0_3 = arith.constant 0 : index
    %2 = vector.load %arg7[%c0_2, %c0_3] : memref<128x128xf32, #tpu.memory_space<vmem>>, vector<128x128xf32>
    %c0_4 = arith.constant 0 : index
    %c0_5 = arith.constant 0 : index
    %c0_6 = arith.constant 0 : index
    %3 = vector.load %arg9[%c0_4, %c0_5, %c0_6] : memref<2x10x128xf32, #tpu.memory_space<vmem>>, vector<2x1x128xf32>
    tpu.vector_store %arg9[%c0_4, %c0_5, %c0_6], %0 {strides = array<i32>} : memref<2x10x128xf32, #tpu.memory_space<vmem>>, vector<2x1x128xf32>,
    %c0_7 = arith.constant 0 : index
    %c9 = arith.constant 9 : index
    %c0_8 = arith.constant 0 : index
    %4 = vector.load %arg9[%c0_7, %c9, %c0_8] : memref<2x10x128xf32, #tpu.memory_space<vmem>>, vector<2x1x128xf32>
    tpu.vector_store %arg9[%c0_7, %c9, %c0_8], %0 {strides = array<i32>} : memref<2x10x128xf32, #tpu.memory_space<vmem>>, vector<2x1x128xf32>,
    %c0_9 = arith.constant 0 : index
    %c1 = arith.constant 1 : index
    %c0_10 = arith.constant 0 : index
    %5 = vector.load %arg9[%c0_9, %c1, %c0_10] : memref<2x10x128xf32, #tpu.memory_space<vmem>>, vector<2x8x128xf32>
    tpu.vector_store %arg9[%c0_9, %c1, %c0_10], %1 {strides = array<i32>} : memref<2x10x128xf32, #tpu.memory_space<vmem>>, vector<2x8x128xf32>,
    %c0_11 = arith.constant 0 : index
    %c0_12 = arith.constant 0 : index
    %c0_13 = arith.constant 0 : index
    %6 = vector.load %arg9[%c0_11, %c0_12, %c0_13] : memref<2x10x128xf32, #tpu.memory_space<vmem>>, vector<2x8x128xf32>
    %7 = arith.truncf %6 : vector<2x8x128xf32> to vector<2x8x128xbf16>
    %c0_14 = arith.constant 0 : index
    %c1_15 = arith.constant 1 : index
    %c0_16 = arith.constant 0 : index
    %8 = vector.load %arg9[%c0_14, %c1_15, %c0_16] : memref<2x10x128xf32, #tpu.memory_space<vmem>>, vector<2x8x128xf32>
    %9 = arith.truncf %8 : vector<2x8x128xf32> to vector<2x8x128xbf16>
    %c0_17 = arith.constant 0 : index
    %c2 = arith.constant 2 : index
    %c0_18 = arith.constant 0 : index
    %10 = vector.load %arg9[%c0_17, %c2, %c0_18] : memref<2x10x128xf32, #tpu.memory_space<vmem>>, vector<2x8x128xf32>
    %11 = arith.truncf %10 : vector<2x8x128xf32> to vector<2x8x128xbf16>
    %12 = tpu.concatenate %7, %9, %11 in 2 : vector<2x8x128xbf16>, vector<2x8x128xbf16>, vector<2x8x128xbf16> -> vector<2x8x384xbf16>
    %13 = vector.shape_cast %12 : vector<2x8x384xbf16> to vector<16x384xbf16>
    %c0_19 = arith.constant 0 : index
    %c0_20 = arith.constant 0 : index
    %14 = vector.load %arg1[%c0_19, %c0_20] : memref<384x128xbf16, #tpu.memory_space<vmem>>, vector<384x128xbf16>
    %cst_21 = arith.constant dense<0.000000e+00> : vector<16x128xf32>
    %15 = tpu.matmul %13, %14, %cst_21 {dimension_numbers = #tpu.dot_dimension_numbers<[1], [0], [0], [1], [0, 0, 1, 1], [], []>} : vector<16x384xbf16>, vector<384x128xbf16>, vector<16x128xf32> -> vector<16x128xf32>
    %c0_22 = arith.constant 0 : index
    %c0_23 = arith.constant 0 : index
    %16 = vector.load %arg3[%c0_22, %c0_23] : memref<1x128xf32, #tpu.memory_space<vmem>>, vector<1x128xf32>
    %c0_24 = arith.constant 0 : index
    %c0_25 = arith.constant 0 : index
    %17 = vector.load %arg4[%c0_24, %c0_25] : memref<1x128xf32, #tpu.memory_space<vmem>>, vector<1x128xf32>
    %cst_26 = arith.constant dense<0.000000e+00> : vector<128xf32>
    %18 = vector.multi_reduction <add>, %15, %cst_26 [0] : vector<16x128xf32> to vector<128xf32>
    %19 = vector.shape_cast %18 : vector<128xf32> to vector<1x128xf32>
    %20 = arith.mulf %15, %15 : vector<16x128xf32>
    %cst_27 = arith.constant dense<0.000000e+00> : vector<128xf32>
    %21 = vector.multi_reduction <add>, %20, %cst_27 [0] : vector<16x128xf32> to vector<128xf32>
    %22 = vector.shape_cast %21 : vector<128xf32> to vector<1x128xf32>
    %23 = tpu.concatenate %19, %22 in 0 : vector<1x128xf32>, vector<1x128xf32> -> vector<2x128xf32>
    %cst_28 = arith.constant dense<0.000000e+00> : vector<2x128xf32>
    %24 = tpu.matmul %23, %2, %cst_28 {dimension_numbers = #tpu.dot_dimension_numbers<[1], [0], [0], [1], [0, 0, 1, 1], [], []>} : vector<2x128xf32>, vector<128x128xf32>, vector<2x128xf32> -> vector<2x128xf32>
    %25 = vector.extract_strided_slice %24 {offsets = [0, 0], sizes = [1, 128], strides = [1, 1]} : vector<2x128xf32> to vector<1x128xf32>
    %26 = vector.extract_strided_slice %24 {offsets = [1, 0], sizes = [1, 128], strides = [1, 1]} : vector<2x128xf32> to vector<1x128xf32>
    %27 = arith.mulf %25, %25 : vector<1x128xf32>
    %28 = arith.subf %26, %27 : vector<1x128xf32>
    %cst_29 = arith.constant 0.000000e+00 : f32
    %29 = vector.broadcast %cst_29 : f32 to vector<1x128xf32>
    %30 = arith.maximumf %28, %29 : vector<1x128xf32>
    %cst_30 = arith.constant 9.99999974E-6 : f32
    %31 = vector.broadcast %cst_30 : f32 to vector<1x128xf32>
    %32 = arith.addf %30, %31 : vector<1x128xf32>
    %33 = math.rsqrt %32 : vector<1x128xf32>
    %34 = arith.mulf %16, %33 : vector<1x128xf32>
    %35 = arith.mulf %25, %34 : vector<1x128xf32>
    %36 = arith.subf %17, %35 : vector<1x128xf32>
    %37 = vector.broadcast %34 : vector<1x128xf32> to vector<16x128xf32>
    %38 = arith.mulf %15, %37 : vector<16x128xf32>
    %39 = vector.broadcast %36 : vector<1x128xf32> to vector<16x128xf32>
    %40 = arith.addf %38, %39 : vector<16x128xf32>
    %cst_31 = arith.constant 0.000000e+00 : f32
    %41 = vector.broadcast %cst_31 : f32 to vector<16x128xf32>
    %42 = arith.maximumf %40, %41 : vector<16x128xf32>
    %c0_32 = arith.constant 0 : index
    %c0_33 = arith.constant 0 : index
    %c0_34 = arith.constant 0 : index
    %43 = vector.load %arg10[%c0_32, %c0_33, %c0_34] : memref<2x10x128xf32, #tpu.memory_space<vmem>>, vector<2x1x128xf32>
    tpu.vector_store %arg10[%c0_32, %c0_33, %c0_34], %0 {strides = array<i32>} : memref<2x10x128xf32, #tpu.memory_space<vmem>>, vector<2x1x128xf32>,
    %c0_35 = arith.constant 0 : index
    %c9_36 = arith.constant 9 : index
    %c0_37 = arith.constant 0 : index
    %44 = vector.load %arg10[%c0_35, %c9_36, %c0_37] : memref<2x10x128xf32, #tpu.memory_space<vmem>>, vector<2x1x128xf32>
    tpu.vector_store %arg10[%c0_35, %c9_36, %c0_37], %0 {strides = array<i32>} : memref<2x10x128xf32, #tpu.memory_space<vmem>>, vector<2x1x128xf32>,
    %45 = vector.shape_cast %42 : vector<16x128xf32> to vector<2x8x128xf32>
    %c0_38 = arith.constant 0 : index
    %c1_39 = arith.constant 1 : index
    %c0_40 = arith.constant 0 : index
    %46 = vector.load %arg10[%c0_38, %c1_39, %c0_40] : memref<2x10x128xf32, #tpu.memory_space<vmem>>, vector<2x8x128xf32>
    tpu.vector_store %arg10[%c0_38, %c1_39, %c0_40], %45 {strides = array<i32>} : memref<2x10x128xf32, #tpu.memory_space<vmem>>, vector<2x8x128xf32>,
    %c0_41 = arith.constant 0 : index
    %c0_42 = arith.constant 0 : index
    %c0_43 = arith.constant 0 : index
    %47 = vector.load %arg10[%c0_41, %c0_42, %c0_43] : memref<2x10x128xf32, #tpu.memory_space<vmem>>, vector<2x8x128xf32>
    %48 = arith.truncf %47 : vector<2x8x128xf32> to vector<2x8x128xbf16>
    %c0_44 = arith.constant 0 : index
    %c1_45 = arith.constant 1 : index
    %c0_46 = arith.constant 0 : index
    %49 = vector.load %arg10[%c0_44, %c1_45, %c0_46] : memref<2x10x128xf32, #tpu.memory_space<vmem>>, vector<2x8x128xf32>
    %50 = arith.truncf %49 : vector<2x8x128xf32> to vector<2x8x128xbf16>
    %c0_47 = arith.constant 0 : index
    %c2_48 = arith.constant 2 : index
    %c0_49 = arith.constant 0 : index
    %51 = vector.load %arg10[%c0_47, %c2_48, %c0_49] : memref<2x10x128xf32, #tpu.memory_space<vmem>>, vector<2x8x128xf32>
    %52 = arith.truncf %51 : vector<2x8x128xf32> to vector<2x8x128xbf16>
    %53 = tpu.concatenate %48, %50, %52 in 2 : vector<2x8x128xbf16>, vector<2x8x128xbf16>, vector<2x8x128xbf16> -> vector<2x8x384xbf16>
    %54 = vector.shape_cast %53 : vector<2x8x384xbf16> to vector<16x384xbf16>
    %c0_50 = arith.constant 0 : index
    %c0_51 = arith.constant 0 : index
    %55 = vector.load %arg2[%c0_50, %c0_51] : memref<384x128xbf16, #tpu.memory_space<vmem>>, vector<384x128xbf16>
    %cst_52 = arith.constant dense<0.000000e+00> : vector<16x128xf32>
    %56 = tpu.matmul %54, %55, %cst_52 {dimension_numbers = #tpu.dot_dimension_numbers<[1], [0], [0], [1], [0, 0, 1, 1], [], []>} : vector<16x384xbf16>, vector<384x128xbf16>, vector<16x128xf32> -> vector<16x128xf32>
    %c0_53 = arith.constant 0 : index
    %c0_54 = arith.constant 0 : index
    %57 = vector.load %arg5[%c0_53, %c0_54] : memref<1x128xf32, #tpu.memory_space<vmem>>, vector<1x128xf32>
    %c0_55 = arith.constant 0 : index
    %c0_56 = arith.constant 0 : index
    %58 = vector.load %arg6[%c0_55, %c0_56] : memref<1x128xf32, #tpu.memory_space<vmem>>, vector<1x128xf32>
    %cst_57 = arith.constant dense<0.000000e+00> : vector<128xf32>
    %59 = vector.multi_reduction <add>, %56, %cst_57 [0] : vector<16x128xf32> to vector<128xf32>
    %60 = vector.shape_cast %59 : vector<128xf32> to vector<1x128xf32>
    %61 = arith.mulf %56, %56 : vector<16x128xf32>
    %cst_58 = arith.constant dense<0.000000e+00> : vector<128xf32>
    %62 = vector.multi_reduction <add>, %61, %cst_58 [0] : vector<16x128xf32> to vector<128xf32>
    %63 = vector.shape_cast %62 : vector<128xf32> to vector<1x128xf32>
    %64 = tpu.concatenate %60, %63 in 0 : vector<1x128xf32>, vector<1x128xf32> -> vector<2x128xf32>
    %cst_59 = arith.constant dense<0.000000e+00> : vector<2x128xf32>
    %65 = tpu.matmul %64, %2, %cst_59 {dimension_numbers = #tpu.dot_dimension_numbers<[1], [0], [0], [1], [0, 0, 1, 1], [], []>} : vector<2x128xf32>, vector<128x128xf32>, vector<2x128xf32> -> vector<2x128xf32>
    %66 = vector.extract_strided_slice %65 {offsets = [0, 0], sizes = [1, 128], strides = [1, 1]} : vector<2x128xf32> to vector<1x128xf32>
    %67 = vector.extract_strided_slice %65 {offsets = [1, 0], sizes = [1, 128], strides = [1, 1]} : vector<2x128xf32> to vector<1x128xf32>
    %68 = arith.mulf %66, %66 : vector<1x128xf32>
    %69 = arith.subf %67, %68 : vector<1x128xf32>
    %cst_60 = arith.constant 0.000000e+00 : f32
    %70 = vector.broadcast %cst_60 : f32 to vector<1x128xf32>
    %71 = arith.maximumf %69, %70 : vector<1x128xf32>
    %cst_61 = arith.constant 9.99999974E-6 : f32
    %72 = vector.broadcast %cst_61 : f32 to vector<1x128xf32>
    %73 = arith.addf %71, %72 : vector<1x128xf32>
    %74 = math.rsqrt %73 : vector<1x128xf32>
    %75 = arith.mulf %57, %74 : vector<1x128xf32>
    %76 = arith.mulf %66, %75 : vector<1x128xf32>
    %77 = arith.subf %58, %76 : vector<1x128xf32>
    %78 = vector.broadcast %75 : vector<1x128xf32> to vector<16x128xf32>
    %79 = arith.mulf %56, %78 : vector<16x128xf32>
    %80 = vector.broadcast %77 : vector<1x128xf32> to vector<16x128xf32>
    %81 = arith.addf %79, %80 : vector<16x128xf32>
    %82 = vector.shape_cast %1 : vector<2x8x128xf32> to vector<16x128xf32>
    %83 = arith.addf %81, %82 : vector<16x128xf32>
    %cst_62 = arith.constant 0.000000e+00 : f32
    %84 = vector.broadcast %cst_62 : f32 to vector<16x128xf32>
    %85 = arith.maximumf %83, %84 : vector<16x128xf32>
    %86 = vector.shape_cast %85 : vector<16x128xf32> to vector<2x8x128xf32>
    %c0_63 = arith.constant 0 : index
    %c0_64 = arith.constant 0 : index
    %c0_65 = arith.constant 0 : index
    %87 = vector.load %arg8[%c0_63, %c0_64, %c0_65] : memref<2x8x128xf32, #tpu.memory_space<vmem>>, vector<2x8x128xf32>
    tpu.vector_store %arg8[%c0_63, %c0_64, %c0_65], %86 {strides = array<i32>} : memref<2x8x128xf32, #tpu.memory_space<vmem>>, vector<2x8x128xf32>,
    return
  }
}

</mosaic_0001>

<llo_original>
// kernel: basic_block_forward_lane.1
$region0: #{basic_block_forward_lane.1}
  #allocation0 [shape = 'u32[]', space=smem, size = 0x4, offset = 0x4, fixed_abs, tag = 'smem constant byte address 0x4 - core index']
  #allocation1 [shape = 'u32[144,128]{1,0:T(1,128)}', space=vmem, size = 0x12000, scoped, tag = 'internal scratch']
  #allocation2 [shape = 'f32[2,10,128]{2,1,0:T(8,128)}', space=vmem, size = 0x4000, scoped, tag = 'scratch operand']
  #allocation3 [shape = 'f32[2,10,128]{2,1,0:T(8,128)}', space=vmem, size = 0x4000, scoped, tag = 'scratch operand']
  %s0 = inlined_call_operand.hbm [shape: f32[2,8,128], index: 0, kind: input, shape index: {}]
  %s1 = inlined_call_operand.hbm [shape: bf16[384,128], index: 1, kind: input, shape index: {}]
  %s2 = inlined_call_operand.hbm [shape: bf16[384,128], index: 2, kind: input, shape index: {}]
  %s3 = inlined_call_operand.vmem [shape: f32[1,128], index: 3, kind: input, shape index: {}]
  %s4 = inlined_call_operand.vmem [shape: f32[1,128], index: 4, kind: input, shape index: {}]
  %s5 = inlined_call_operand.vmem [shape: f32[1,128], index: 5, kind: input, shape index: {}]
  %s6 = inlined_call_operand.vmem [shape: f32[1,128], index: 6, kind: input, shape index: {}]
  %s7 = inlined_call_operand.hbm [shape: f32[128,128], index: 7, kind: input, shape index: {}]
  %s8 = inlined_call_operand.hbm [shape: f32[2,8,128], index: 8, kind: output, shape index: {}]
  %s9 = sld [smem:[#allocation0]]
  $region58: #{basic_block_forward_lane.1} parent=0
    _
  %s11 = ssub.s32 1, %s9
  %s12 = scalar_select 0, %s11, %s9
  $region1: #{basic_block_forward_lane.1} parent=0
    #allocation4 [shape = 'u8[8192]{0}', space=vmem, size = 0x2000, scoped, tag = 'input window, operand 0, single buffered']
    #allocation5 [shape = 's32[1]{0}', space=sflag, size = 0x4, scoped, tag = 'scoped memory for basic_block_forward_lane.1']
    #allocation6 [shape = 's32[1]{0}', space=sflag, size = 0x4, scoped, tag = 'scoped memory for basic_block_forward_lane.1']
    #allocation7 [shape = 'u8[98304]{0}', space=vmem, size = 0x18000, scoped, tag = 'input window, operand 1, single buffered']
    #allocation8 [shape = 's32[1]{0}', space=sflag, size = 0x4, scoped, tag = 'scoped memory for basic_block_forward_lane.1']
    #allocation9 [shape = 'u8[98304]{0}', space=vmem, size = 0x18000, scoped, tag = 'input window, operand 2, single buffered']
    #allocation10 [shape = 'u8[65536]{0}', space=vmem, size = 0x10000, scoped, tag = 'input window, operand 7, single buffered']
    #allocation11 [shape = 's32[1]{0}', space=sflag, size = 0x4, scoped, tag = 'scoped memory for basic_block_forward_lane.1']
    #allocation12 [shape = 'u8[8192]{0}', space=vmem, size = 0x2000, scoped, tag = 'output window, operand 0, single buffered']
    %13 = vsyncpa [#allocation5], 0
    %14 = vsyncpa [#allocation8], 0
    %15 = vsyncpa [#allocation11], 0
    %16 = vsyncpa [#allocation6], 0
    // Predicated region
    $region2: #{basic_block_forward_lane.1} parent=1 // pred_check
      _
    $region3: #{basic_block_forward_lane.1} parent=1 // pred_check_branch
      %18 = sbr.rel (0) target = $region5
    $region4: #{basic_block_forward_lane.1} parent=1 // pred_region
      %s20 = ssub.s32 256, 256
      %21 = vsyncadd [#allocation5], %s20
      %s22 = sshll.u32 [#allocation4], 4
      %s23 = int_to_ptr.vmem [resolvable:$true] %s22
      %28 = dma.hbm_to_vmem [thread:$0]  %s0, 256, %s23, [#allocation5], 128, 128, 8
    $region5: #{basic_block_forward_lane.1} parent=1 // pred_fallthru
      _
    // Predicated region
    $region6: #{basic_block_forward_lane.1} parent=1 // pred_check
      _
    $region7: #{basic_block_forward_lane.1} parent=1 // pred_check_branch
      %30 = sbr.rel (0) target = $region9
    $region8: #{basic_block_forward_lane.1} parent=1 // pred_region
      %s32 = ssub.s32 3072, 3072
      %33 = vsyncadd [#allocation8], %s32
      %s34 = sshll.u32 [#allocation7], 4
      %s35 = int_to_ptr.vmem [resolvable:$true] %s34
      %40 = dma.hbm_to_vmem [thread:$0]  %s1, 3072, %s35, [#allocation8], 64, 64, 4
    $region9: #{basic_block_forward_lane.1} parent=1 // pred_fallthru
      _
    // Predicated region
    $region10: #{basic_block_forward_lane.1} parent=1 // pred_check
      _
    $region11: #{basic_block_forward_lane.1} parent=1 // pred_check_branch
      %42 = sbr.rel (0) target = $region13
    $region12: #{basic_block_forward_lane.1} parent=1 // pred_region
      %s44 = ssub.s32 3072, 3072
      %45 = vsyncadd [#allocation8], %s44
      %s46 = sshll.u32 [#allocation9], 4
      %s47 = int_to_ptr.vmem [resolvable:$true] %s46
      %52 = dma.hbm_to_vmem [thread:$0]  %s2, 3072, %s47, [#allocation8], 64, 64, 4
    $region13: #{basic_block_forward_lane.1} parent=1 // pred_fallthru
      _
    // Predicated region
    $region14: #{basic_block_forward_lane.1} parent=1 // pred_check
      _
    $region15: #{basic_block_forward_lane.1} parent=1 // pred_check_branch
      %54 = sbr.rel (0) target = $region17
    $region16: #{basic_block_forward_lane.1} parent=1 // pred_region
      _
    $region17: #{basic_block_forward_lane.1} parent=1 // pred_fallthru
      _
    // Predicated region
    $region18: #{basic_block_forward_lane.1} parent=1 // pred_check
      _
    $region19: #{basic_block_forward_lane.1} parent=1 // pred_check_branch
      %56 = sbr.rel (0) target = $region21
    $region20: #{basic_block_forward_lane.1} parent=1 // pred_region
      _
    $region21: #{basic_block_forward_lane.1} parent=1 // pred_fallthru
      _
    // Predicated region
    $region22: #{basic_block_forward_lane.1} parent=1 // pred_check
      _
    $region23: #{basic_block_forward_lane.1} parent=1 // pred_check_branch
      %58 = sbr.rel (0) target = $region25
    $region24: #{basic_block_forward_lane.1} parent=1 // pred_region
      _
    $region25: #{basic_block_forward_lane.1} parent=1 // pred_fallthru
      _
    // Predicated region
    $region26: #{basic_block_forward_lane.1} parent=1 // pred_check
      _
    $region27: #{basic_block_forward_lane.1} parent=1 // pred_check_branch
      %60 = sbr.rel (0) target = $region29
    $region28: #{basic_block_forward_lane.1} parent=1 // pred_region
      _
    $region29: #{basic_block_forward_lane.1} parent=1 // pred_fallthru
      _
    // Predicated region
    $region30: #{basic_block_forward_lane.1} parent=1 // pred_check
      _
    $region31: #{basic_block_forward_lane.1} parent=1 // pred_check_branch
      %62 = sbr.rel (0) target = $region33
    $region32: #{basic_block_forward_lane.1} parent=1 // pred_region
      %s64 = ssub.s32 2048, 2048
      %65 = vsyncadd [#allocation11], %s64
      %s66 = sshll.u32 [#allocation10], 4
      %s67 = int_to_ptr.vmem [resolvable:$true] %s66
      %72 = dma.hbm_to_vmem [thread:$0]  %s7, 2048, %s67, [#allocation11], 128, 128, 8
    $region33: #{basic_block_forward_lane.1} parent=1 // pred_fallthru
      _
    // Predicated region
    $region34: #{basic_block_forward_lane.1} parent=1 // pred_check
      _
    $region35: #{basic_block_forward_lane.1} parent=1 // pred_check_branch
      %74 = sbr.rel (0) target = $region37
    $region36: #{basic_block_forward_lane.1} parent=1 // pred_region
      %75 = dma.done [#allocation5], 256
    $region37: #{basic_block_forward_lane.1} parent=1 // pred_fallthru
      _
    // Predicated region
    $region38: #{basic_block_forward_lane.1} parent=1 // pred_check
      _
    $region39: #{basic_block_forward_lane.1} parent=1 // pred_check_branch
      %77 = sbr.rel (0) target = $region41
    $region40: #{basic_block_forward_lane.1} parent=1 // pred_region
      %78 = dma.done [#allocation8], 3072
    $region41: #{basic_block_forward_lane.1} parent=1 // pred_fallthru
      _
    // Predicated region
    $region42: #{basic_block_forward_lane.1} parent=1 // pred_check
      _
    $region43: #{basic_block_forward_lane.1} parent=1 // pred_check_branch
      %80 = sbr.rel (0) target = $region45
    $region44: #{basic_block_forward_lane.1} parent=1 // pred_region
      %81 = dma.done [#allocation8], 3072
    $region45: #{basic_block_forward_lane.1} parent=1 // pred_fallthru
      _
    // Predicated region
    $region46: #{basic_block_forward_lane.1} parent=1 // pred_check
      _
    $region47: #{basic_block_forward_lane.1} parent=1 // pred_check_branch
      %83 = sbr.rel (0) target = $region49
    $region48: #{basic_block_forward_lane.1} parent=1 // pred_region
      %84 = dma.done [#allocation11], 2048
    $region49: #{basic_block_forward_lane.1} parent=1 // pred_fallthru
      _
    %v86 = vld [vmem:[#allocation4] sm:$0xff]
    %v87 = vld [vmem:[#allocation4 + $0x8] sm:$0xff]
    %v88 = vld [vmem:[#allocation10] sm:$0xff]
    %v89 = vld [vmem:[#allocation10 + $0x8] sm:$0xff]
    %v90 = vld [vmem:[#allocation10 + $0x10] sm:$0xff]
    %v91 = vld [vmem:[#allocation10 + $0x18] sm:$0xff]
    %v92 = vld [vmem:[#allocation10 + $0x20] sm:$0xff]
    %v93 = vld [vmem:[#allocation10 + $0x28] sm:$0xff]
    %v94 = vld [vmem:[#allocation10 + $0x30] sm:$0xff]
    %v95 = vld [vmem:[#allocation10 + $0x38] sm:$0xff]
    %v96 = vld [vmem:[#allocation10 + $0x40] sm:$0xff]
    %v97 = vld [vmem:[#allocation10 + $0x48] sm:$0xff]
    %v98 = vld [vmem:[#allocation10 + $0x50] sm:$0xff]
    %v99 = vld [vmem:[#allocation10 + $0x58] sm:$0xff]
    %v100 = vld [vmem:[#allocation10 + $0x60] sm:$0xff]
    %v101 = vld [vmem:[#allocation10 + $0x68] sm:$0xff]
    %v102 = vld [vmem:[#allocation10 + $0x70] sm:$0xff]
    %v103 = vld [vmem:[#allocation10 + $0x78] sm:$0xff]
    %104 = vst [vmem:[#allocation2] sm:$0x1] 0.0
    %105 = vst [vmem:[#allocation2 + $0x10] sm:$0x1] 0.0
    %106 = vst [vmem:[#allocation2 + $0x9] sm:$0x1] 0.0
    %107 = vst [vmem:[#allocation2 + $0x19] sm:$0x1] 0.0
    %108 = vst [vmem:[#allocation2 + $0x1] sm:$0xff] %v86
    %109 = vst [vmem:[#allocation2 + $0x11] sm:$0xff] %v87
    %v110 = vld [vmem:[#allocation2] sm:$0xff]
    %v111 = vld [vmem:[#allocation2 + $0x10] sm:$0xff]
    %v112 = vpack.c.bf16 %v110, %v110
    %v113 = vpack.c.bf16 %v111, %v111
    %v114 = vld [vmem:[#allocation2 + $0x1] sm:$0xff]
    %v115 = vld [vmem:[#allocation2 + $0x11] sm:$0xff]
    %v116 = vpack.c.bf16 %v114, %v114
    %v117 = vpack.c.bf16 %v115, %v115
    %v118 = vld [vmem:[#allocation2 + $0x2] sm:$0xff]
    %v119 = vld [vmem:[#allocation2 + $0x12] sm:$0xff]
    %v120 = vpack.c.bf16 %v118, %v118
    %v121 = vpack.c.bf16 %v119, %v119
    %v128 = vunpack.c.l.b16 %v112
    %v129 = vunpack.c.l.b16 %v116
    %v130 = vunpack.c.l.b16 %v120
    %v131 = vunpack.c.l.b16 %v113
    %v132 = vunpack.c.l.b16 %v117
    %v133 = vunpack.c.l.b16 %v121
    %v134 = vld [vmem:[#allocation7] sm:$0xf]
    %v135 = vld [vmem:[#allocation7 + $0x4] sm:$0xf]
    %v136 = vld [vmem:[#allocation7 + $0x8] sm:$0xf]
    %v137 = vld [vmem:[#allocation7 + $0xc] sm:$0xf]
    %v138 = vld [vmem:[#allocation7 + $0x10] sm:$0xf]
    %v139 = vld [vmem:[#allocation7 + $0x14] sm:$0xf]
    %v140 = vld [vmem:[#allocation7 + $0x18] sm:$0xf]
    %v141 = vld [vmem:[#allocation7 + $0x1c] sm:$0xf]
    %v142 = vld [vmem:[#allocation7 + $0x20] sm:$0xf]
    %v143 = vld [vmem:[#allocation7 + $0x24] sm:$0xf]
    %v144 = vld [vmem:[#allocation7 + $0x28] sm:$0xf]
    %v145 = vld [vmem:[#allocation7 + $0x2c] sm:$0xf]
    %v146 = vld [vmem:[#allocation7 + $0x30] sm:$0xf]
    %v147 = vld [vmem:[#allocation7 + $0x34] sm:$0xf]
    %v148 = vld [vmem:[#allocation7 + $0x38] sm:$0xf]
    %v149 = vld [vmem:[#allocation7 + $0x3c] sm:$0xf]
    %v150 = vld [vmem:[#allocation7 + $0x40] sm:$0xf]
    %v151 = vld [vmem:[#allocation7 + $0x44] sm:$0xf]
    %v152 = vld [vmem:[#allocation7 + $0x48] sm:$0xf]
    %v153 = vld [vmem:[#allocation7 + $0x4c] sm:$0xf]
    %v154 = vld [vmem:[#allocation7 + $0x50] sm:$0xf]
    %v155 = vld [vmem:[#allocation7 + $0x54] sm:$0xf]
    %v156 = vld [vmem:[#allocation7 + $0x58] sm:$0xf]
    %v157 = vld [vmem:[#allocation7 + $0x5c] sm:$0xf]
    %v158 = vld [vmem:[#allocation7 + $0x60] sm:$0xf]
    %v159 = vld [vmem:[#allocation7 + $0x64] sm:$0xf]
    %v160 = vld [vmem:[#allocation7 + $0x68] sm:$0xf]
    %v161 = vld [vmem:[#allocation7 + $0x6c] sm:$0xf]
    %v162 = vld [vmem:[#allocation7 + $0x70] sm:$0xf]
    %v163 = vld [vmem:[#allocation7 + $0x74] sm:$0xf]
    %v164 = vld [vmem:[#allocation7 + $0x78] sm:$0xf]
    %v165 = vld [vmem:[#allocation7 + $0x7c] sm:$0xf]
    %v166 = vld [vmem:[#allocation7 + $0x80] sm:$0xf]
    %v167 = vld [vmem:[#allocation7 + $0x84] sm:$0xf]
    %v168 = vld [vmem:[#allocation7 + $0x88] sm:$0xf]
    %v169 = vld [vmem:[#allocation7 + $0x8c] sm:$0xf]
    %v170 = vld [vmem:[#allocation7 + $0x90] sm:$0xf]
    %v171 = vld [vmem:[#allocation7 + $0x94] sm:$0xf]
    %v172 = vld [vmem:[#allocation7 + $0x98] sm:$0xf]
    %v173 = vld [vmem:[#allocation7 + $0x9c] sm:$0xf]
    %v174 = vld [vmem:[#allocation7 + $0xa0] sm:$0xf]
    %v175 = vld [vmem:[#allocation7 + $0xa4] sm:$0xf]
    %v176 = vld [vmem:[#allocation7 + $0xa8] sm:$0xf]
    %v177 = vld [vmem:[#allocation7 + $0xac] sm:$0xf]
    %v178 = vld [vmem:[#allocation7 + $0xb0] sm:$0xf]
    %v179 = vld [vmem:[#allocation7 + $0xb4] sm:$0xf]
    %v180 = vld [vmem:[#allocation7 + $0xb8] sm:$0xf]
    %v181 = vld [vmem:[#allocation7 + $0xbc] sm:$0xf]
    %v182 = vpack.c.b16 %v131, %v128
    %v183 = vpack.c.b16 %v132, %v129
    %v184 = vpack.c.b16 %v133, %v130
    %v236 = vunpack.c.l.b16 %v134
    %v237 = vunpack.c.l.b16 %v135
    %v238 = vunpack.c.l.b16 %v136
    %v239 = vunpack.c.l.b16 %v137
    %v240 = vunpack.c.l.b16 %v138
    %v241 = vunpack.c.l.b16 %v139
    %v242 = vunpack.c.l.b16 %v140
    %v243 = vunpack.c.l.b16 %v141
    %v244 = vunpack.c.l.b16 %v142
    %v245 = vunpack.c.l.b16 %v143
    %v246 = vunpack.c.l.b16 %v144
    %v247 = vunpack.c.l.b16 %v145
    %v248 = vunpack.c.l.b16 %v146
    %v249 = vunpack.c.l.b16 %v147
    %v250 = vunpack.c.l.b16 %v148
    %v251 = vunpack.c.l.b16 %v149
    %v252 = vunpack.c.l.b16 %v150
    %v253 = vunpack.c.l.b16 %v151
    %v254 = vunpack.c.l.b16 %v152
    %v255 = vunpack.c.l.b16 %v153
    %v256 = vunpack.c.l.b16 %v154
    %v257 = vunpack.c.l.b16 %v155
    %v258 = vunpack.c.l.b16 %v156
    %v259 = vunpack.c.l.b16 %v157
    %v260 = vunpack.c.l.b16 %v158
    %v261 = vunpack.c.l.b16 %v159
    %v262 = vunpack.c.l.b16 %v160
    %v263 = vunpack.c.l.b16 %v161
    %v264 = vunpack.c.l.b16 %v162
    %v265 = vunpack.c.l.b16 %v163
    %v266 = vunpack.c.l.b16 %v164
    %v267 = vunpack.c.l.b16 %v165
    %v268 = vunpack.c.l.b16 %v166
    %v269 = vunpack.c.l.b16 %v167
    %v270 = vunpack.c.l.b16 %v168
    %v271 = vunpack.c.l.b16 %v169
    %v272 = vunpack.c.l.b16 %v170
    %v273 = vunpack.c.l.b16 %v171
    %v274 = vunpack.c.l.b16 %v172
    %v275 = vunpack.c.l.b16 %v173
    %v276 = vunpack.c.l.b16 %v174
    %v277 = vunpack.c.l.b16 %v175
    %v278 = vunpack.c.l.b16 %v176
    %v279 = vunpack.c.l.b16 %v177
    %v280 = vunpack.c.l.b16 %v178
    %v281 = vunpack.c.l.b16 %v179
    %v282 = vunpack.c.l.b16 %v180
    %v283 = vunpack.c.l.b16 %v181
    %v284 = vpack.c.b16 %v237, %v236
    %v285 = vpack.c.b16 %v239, %v238
    %v286 = vpack.c.b16 %v241, %v240
    %v287 = vpack.c.b16 %v243, %v242
    %v288 = vpack.c.b16 %v245, %v244
    %v289 = vpack.c.b16 %v247, %v246
    %v290 = vpack.c.b16 %v249, %v248
    %v291 = vpack.c.b16 %v251, %v250
    %v292 = vpack.c.b16 %v253, %v252
    %v293 = vpack.c.b16 %v255, %v254
    %v294 = vpack.c.b16 %v257, %v256
    %v295 = vpack.c.b16 %v259, %v258
    %v296 = vpack.c.b16 %v261, %v260
    %v297 = vpack.c.b16 %v263, %v262
    %v298 = vpack.c.b16 %v265, %v264
    %v299 = vpack.c.b16 %v267, %v266
    %v300 = vpack.c.b16 %v269, %v268
    %v301 = vpack.c.b16 %v271, %v270
    %v302 = vpack.c.b16 %v273, %v272
    %v303 = vpack.c.b16 %v275, %v274
    %v304 = vpack.c.b16 %v277, %v276
    %v305 = vpack.c.b16 %v279, %v278
    %v306 = vpack.c.b16 %v281, %v280
    %v307 = vpack.c.b16 %v283, %v282
    %332 = vmatprep.subr.bf16.mxu0 0
    %333 = vmatpush1.bf16.msra.mxu0 %v284
    %334 = vmatprep.subr.bf16.mxu0 0
    %335 = vmatpush1.bf16.msra.mxu0 %v285
    %336 = vmatprep.subr.bf16.mxu0 0
    %337 = vmatpush1.bf16.msra.mxu0 %v286
    %338 = vmatprep.subr.bf16.mxu0 0
    %339 = vmatpush1.bf16.msra.mxu0 %v287
    %340 = vmatprep.subr.bf16.mxu0 0
    %341 = vmatpush1.bf16.msra.mxu0 %v288
    %342 = vmatprep.subr.bf16.mxu0 0
    %343 = vmatpush1.bf16.msra.mxu0 %v289
    %344 = vmatprep.subr.bf16.mxu0 0
    %345 = vmatpush1.bf16.msra.mxu0 %v290
    %346 = vmatprep.subr.bf16.mxu0 0
    %347 = vmatpush1.bf16.msra.mxu0 %v291
    %348 = vmatprep.subr.bf16.mxu0 0
    %349 = vmatpush1.bf16.msra.mxu0 %v292
    %350 = vmatprep.subr.bf16.mxu0 0
    %351 = vmatpush1.bf16.msra.mxu0 %v293
    %352 = vmatprep.subr.bf16.mxu0 0
    %353 = vmatpush1.bf16.msra.mxu0 %v294
    %354 = vmatprep.subr.bf16.mxu0 0
    %355 = vmatpush1.bf16.msra.mxu0 %v295
    %356 = vmatprep.subr.bf16.mxu0 0
    %357 = vmatpush1.bf16.msra.mxu0 %v296
    %358 = vmatprep.subr.bf16.mxu0 0
    %359 = vmatpush1.bf16.msra.mxu0 %v297
    %360 = vmatprep.subr.bf16.mxu0 0
    %361 = vmatpush1.bf16.msra.mxu0 %v298
    %362 = vmatprep.subr.bf16.mxu0 0
    %363 = vmatpush1.bf16.msra.mxu0 %v299
    %364 = vmatprep.mubr.bf16.mxu0 %v183
    %365 = vmatmul.mubr.bf16.gmra.mrb[0].mxu0 %v182
    %v366 = vpop.f32.mrb[0].mxu0
    %v367 = vadd.f32 0.0, %v366
    %v368 = vpop.f32.mrb[0].mxu0
    %v369 = vpop.f32.mrb[0].mxu0
    %v370 = vadd.f32 0.0, %v369
    %v371 = vpop.f32.mrb[0].mxu0
    %372 = vdwg.mxu0
    %373 = vmatprep.subr.bf16.mxu0 0
    %374 = vmatpush1.bf16.msra.mxu0 %v300
    %375 = vmatprep.subr.bf16.mxu0 0
    %376 = vmatpush1.bf16.msra.mxu0 %v301
    %377 = vmatprep.subr.bf16.mxu0 0
    %378 = vmatpush1.bf16.msra.mxu0 %v302
    %379 = vmatprep.subr.bf16.mxu0 0
    %380 = vmatpush1.bf16.msra.mxu0 %v303
    %381 = vmatprep.subr.bf16.mxu0 0
    %382 = vmatpush1.bf16.msra.mxu0 %v304
    %383 = vmatprep.subr.bf16.mxu0 0
    %384 = vmatpush1.bf16.msra.mxu0 %v305
    %385 = vmatprep.subr.bf16.mxu0 0
    %386 = vmatpush1.bf16.msra.mxu0 %v306
    %387 = vmatprep.subr.bf16.mxu0 0
    %388 = vmatpush1.bf16.msra.mxu0 %v307
    %389 = vmatprep.subr.bf16.mxu0 0
    %390 = vmatpush1.bf16.msra.mxu0 0
    %391 = vmatprep.subr.bf16.mxu0 0
    %392 = vmatpush1.bf16.msra.mxu0 0
    %393 = vmatprep.subr.bf16.mxu0 0
    %394 = vmatpush1.bf16.msra.mxu0 0
    %395 = vmatprep.subr.bf16.mxu0 0
    %396 = vmatpush1.bf16.msra.mxu0 0
    %397 = vmatprep.subr.bf16.mxu0 0
    %398 = vmatpush1.bf16.msra.mxu0 0
    %399 = vmatprep.subr.bf16.mxu0 0
    %400 = vmatpush1.bf16.msra.mxu0 0
    %401 = vmatprep.subr.bf16.mxu0 0
    %402 = vmatpush1.bf16.msra.mxu0 0
    %403 = vmatprep.subr.bf16.mxu0 0
    %404 = vmatpush1.bf16.msra.mxu0 0
    %405 = vmatprep.mubr.bf16.mxu0 0
    %406 = vmatmul.mubr.bf16.gmra.mrb[0].mxu0 %v184
    %v407 = vpop.f32.mrb[0].mxu0
    %v408 = vadd.f32 %v367, %v407
    %v409 = vpop.f32.mrb[0].mxu0
    %v410 = vpop.f32.mrb[0].mxu0
    %v411 = vadd.f32 %v370, %v410
    %v412 = vpop.f32.mrb[0].mxu0
    %413 = vdwg.mxu0
    %v414 = vld [vmem:[%s3] sm:$0x1]
    %v415 = vld [vmem:[%s4] sm:$0x1]
    %v416 = vadd.f32 %v408, %v411
    %v417 = vrot.slane %v416, 4
    %v418 = vadd.f32 %v416, %v417
    %v419 = vrot.slane %v418, 2
    %v420 = vadd.f32 %v418, %v419
    %v421 = vrot.slane %v420, 1
    %v422 = vadd.f32 %v420, %v421
    %v423 = vmul.f32 %v408, %v408
    %v424 = vmul.f32 %v411, %v411
    %v425 = vadd.f32 %v423, %v424
    %v426 = vrot.slane %v425, 4
    %v427 = vadd.f32 %v425, %v426
    %v428 = vrot.slane %v427, 2
    %v429 = vadd.f32 %v427, %v428
    %v430 = vrot.slane %v429, 1
    %v431 = vadd.f32 %v429, %v430
    %vm432 = vcmask 1040384
    %v433 = vsel %vm432, %v422, %v431
    %434 = vmatprep.subr.mxu0 0.0
    %435 = vmatpush1.msra.mxu0 %v88
    %436 = vmatprep.subr.mxu0 0.0
    %437 = vmatpush1.msra.mxu0 %v89
    %438 = vmatprep.subr.mxu0 0.0
    %439 = vmatpush1.msra.mxu0 %v90
    %440 = vmatprep.subr.mxu0 0.0
    %441 = vmatpush1.msra.mxu0 %v91
    %442 = vmatprep.subr.mxu0 0.0
    %443 = vmatpush1.msra.mxu0 %v92
    %444 = vmatprep.subr.mxu0 0.0
    %445 = vmatpush1.msra.mxu0 %v93
    %446 = vmatprep.subr.mxu0 0.0
    %447 = vmatpush1.msra.mxu0 %v94
    %448 = vmatprep.subr.mxu0 0.0
    %449 = vmatpush1.msra.mxu0 %v95
    %450 = vmatprep.subr.mxu0 0.0
    %451 = vmatpush1.msra.mxu0 %v96
    %452 = vmatprep.subr.mxu0 0.0
    %453 = vmatpush1.msra.mxu0 %v97
    %454 = vmatprep.subr.mxu0 0.0
    %455 = vmatpush1.msra.mxu0 %v98
    %456 = vmatprep.subr.mxu0 0.0
    %457 = vmatpush1.msra.mxu0 %v99
    %458 = vmatprep.subr.mxu0 0.0
    %459 = vmatpush1.msra.mxu0 %v100
    %460 = vmatprep.subr.mxu0 0.0
    %461 = vmatpush1.msra.mxu0 %v101
    %462 = vmatprep.subr.mxu0 0.0
    %463 = vmatpush1.msra.mxu0 %v102
    %464 = vmatprep.subr.mxu0 0.0
    %465 = vmatpush1.msra.mxu0 %v103
    %466 = vmatprep.subr.mxu0 0.0
    %467 = vmatpush1.msra.mxu0 0.0
    %468 = vmatprep.subr.mxu0 0.0
    %469 = vmatpush1.msra.mxu0 0.0
    %470 = vmatprep.subr.mxu0 0.0
    %471 = vmatpush1.msra.mxu0 0.0
    %472 = vmatprep.subr.mxu0 0.0
    %473 = vmatpush1.msra.mxu0 0.0
    %474 = vmatprep.subr.mxu0 0.0
    %475 = vmatpush1.msra.mxu0 0.0
    %476 = vmatprep.subr.mxu0 0.0
    %477 = vmatpush1.msra.mxu0 0.0
    %478 = vmatprep.subr.mxu0 0.0
    %479 = vmatpush1.msra.mxu0 0.0
    %480 = vmatprep.subr.mxu0 0.0
    %481 = vmatpush1.msra.mxu0 0.0
    %482 = vmatprep.subr.mxu0 0.0
    %483 = vmatpush1.msra.mxu0 0.0
    %484 = vmatprep.subr.mxu0 0.0
    %485 = vmatpush1.msra.mxu0 0.0
    %486 = vmatprep.subr.mxu0 0.0
    %487 = vmatpush1.msra.mxu0 0.0
    %488 = vmatprep.subr.mxu0 0.0
    %489 = vmatpush1.msra.mxu0 0.0
    %490 = vmatprep.subr.mxu0 0.0
    %491 = vmatpush1.msra.mxu0 0.0
    %492 = vmatprep.subr.mxu0 0.0
    %493 = vmatpush1.msra.mxu0 0.0
    %494 = vmatprep.subr.mxu0 0.0
    %495 = vmatpush1.msra.mxu0 0.0
    %496 = vmatprep.subr.mxu0 0.0
    %497 = vmatpush1.msra.mxu0 0.0
    %498 = vmatprep.mubr.f32.mxu0 0.0
    %499 = vmatmul.mubr.f32.gmra.mrb[0].mxu0 %v433
    %v500 = vpop.f32.mrb[0].mxu0
    %v501 = vadd.f32 0.0, %v500
    %v502 = vpop.f32.mrb[0].mxu0
    %503 = vdwg.mxu0
    %v504 = vmul.f32 %v501, %v501
    %v506 = vrot.slane %v504, 7
    %v508 = vsub.f32 %v501, %v506
    %v509 = vmax.f32 %v508, 0.0
    %v510 = vadd.f32 %v509, 1e-05
    %v511 = vrsqrt.pop %v510
    %v514 = vunpack.c.l.s4 1966171168
    %v515 = vunpack.c.0.s8 %v514
    %v516 = vlaneseq
    %v517 = vshrl.u32 %v516, 7
    %v518 = vsub.s32 %v515, %v517
    %v519 = vrot.slane %v511, %v518
    %v520 = vcombine.high %v519, %v519
    %v522 = vunpack.c.l.s4 1966171168
    %v523 = vunpack.c.0.s8 %v522
    %v524 = vlaneseq
    %v525 = vshrl.u32 %v524, 7
    %v526 = vsub.s32 %v523, %v525
    %v527 = vrot.slane %v520, %v526
    %v529 = vmul.f32 %v414, %v527
    %v530 = vmul.f32 %v501, %v529
    %v531 = vsub.f32 %v415, %v530
    %v533 = vlaneseq
    %v534 = vshrl.u32 %v533, 7
    %v535 = vsub.s32 0, %v534
    %v536 = vrot.slane %v529, %v535
    %v538 = vmul.f32 %v408, %v536
    %v539 = vmul.f32 %v411, %v536
    %v541 = vlaneseq
    %v542 = vshrl.u32 %v541, 7
    %v543 = vsub.s32 0, %v542
    %v544 = vrot.slane %v531, %v543
    %v546 = vadd.f32 %v538, %v544
    %v547 = vadd.f32 %v539, %v544
    %v548 = vmax.f32 %v546, 0.0
    %v549 = vmax.f32 %v547, 0.0
    %550 = vst [vmem:[#allocation3] sm:$0x1] 0.0
    %551 = vst [vmem:[#allocation3 + $0x10] sm:$0x1] 0.0
    %552 = vst [vmem:[#allocation3 + $0x9] sm:$0x1] 0.0
    %553 = vst [vmem:[#allocation3 + $0x19] sm:$0x1] 0.0
    %554 = vst [vmem:[#allocation3 + $0x1] sm:$0xff] %v548
    %555 = vst [vmem:[#allocation3 + $0x11] sm:$0xff] %v549
    %v556 = vld [vmem:[#allocation3] sm:$0xff]
    %v557 = vld [vmem:[#allocation3 + $0x10] sm:$0xff]
    %v558 = vpack.c.bf16 %v556, %v556
    %v559 = vpack.c.bf16 %v557, %v557
    %v560 = vld [vmem:[#allocation3 + $0x1] sm:$0xff]
    %v561 = vld [vmem:[#allocation3 + $0x11] sm:$0xff]
    %v562 = vpack.c.bf16 %v560, %v560
    %v563 = vpack.c.bf16 %v561, %v561
    %v564 = vld [vmem:[#allocation3 + $0x2] sm:$0xff]
    %v565 = vld [vmem:[#allocation3 + $0x12] sm:$0xff]
    %v566 = vpack.c.bf16 %v564, %v564
    %v567 = vpack.c.bf16 %v565, %v565
    %v574 = vunpack.c.l.b16 %v558
    %v575 = vunpack.c.l.b16 %v562
    %v576 = vunpack.c.l.b16 %v566
    %v577 = vunpack.c.l.b16 %v559
    %v578 = vunpack.c.l.b16 %v563
    %v579 = vunpack.c.l.b16 %v567
    %v580 = vld [vmem:[#allocation9] sm:$0xf]
    %v581 = vld [vmem:[#allocation9 + $0x4] sm:$0xf]
    %v582 = vld [vmem:[#allocation9 + $0x8] sm:$0xf]
    %v583 = vld [vmem:[#allocation9 + $0xc] sm:$0xf]
    %v584 = vld [vmem:[#allocation9 + $0x10] sm:$0xf]
    %v585 = vld [vmem:[#allocation9 + $0x14] sm:$0xf]
    %v586 = vld [vmem:[#allocation9 + $0x18] sm:$0xf]
    %v587 = vld [vmem:[#allocation9 + $0x1c] sm:$0xf]
    %v588 = vld [vmem:[#allocation9 + $0x20] sm:$0xf]
    %v589 = vld [vmem:[#allocation9 + $0x24] sm:$0xf]
    %v590 = vld [vmem:[#allocation9 + $0x28] sm:$0xf]
    %v591 = vld [vmem:[#allocation9 + $0x2c] sm:$0xf]
    %v592 = vld [vmem:[#allocation9 + $0x30] sm:$0xf]
    %v593 = vld [vmem:[#allocation9 + $0x34] sm:$0xf]
    %v594 = vld [vmem:[#allocation9 + $0x38] sm:$0xf]
    %v595 = vld [vmem:[#allocation9 + $0x3c] sm:$0xf]
    %v596 = vld [vmem:[#allocation9 + $0x40] sm:$0xf]
    %v597 = vld [vmem:[#allocation9 + $0x44] sm:$0xf]
    %v598 = vld [vmem:[#allocation9 + $0x48] sm:$0xf]
    %v599 = vld [vmem:[#allocation9 + $0x4c] sm:$0xf]
    %v600 = vld [vmem:[#allocation9 + $0x50] sm:$0xf]
    %v601 = vld [vmem:[#allocation9 + $0x54] sm:$0xf]
    %v602 = vld [vmem:[#allocation9 + $0x58] sm:$0xf]
    %v603 = vld [vmem:[#allocation9 + $0x5c] sm:$0xf]
    %v604 = vld [vmem:[#allocation9 + $0x60] sm:$0xf]
    %v605 = vld [vmem:[#allocation9 + $0x64] sm:$0xf]
    %v606 = vld [vmem:[#allocation9 + $0x68] sm:$0xf]
    %v607 = vld [vmem:[#allocation9 + $0x6c] sm:$0xf]
    %v608 = vld [vmem:[#allocation9 + $0x70] sm:$0xf]
    %v609 = vld [vmem:[#allocation9 + $0x74] sm:$0xf]
    %v610 = vld [vmem:[#allocation9 + $0x78] sm:$0xf]
    %v611 = vld [vmem:[#allocation9 + $0x7c] sm:$0xf]
    %v612 = vld [vmem:[#allocation9 + $0x80] sm:$0xf]
    %v613 = vld [vmem:[#allocation9 + $0x84] sm:$0xf]
    %v614 = vld [vmem:[#allocation9 + $0x88] sm:$0xf]
    %v615 = vld [vmem:[#allocation9 + $0x8c] sm:$0xf]
    %v616 = vld [vmem:[#allocation9 + $0x90] sm:$0xf]
    %v617 = vld [vmem:[#allocation9 + $0x94] sm:$0xf]
    %v618 = vld [vmem:[#allocation9 + $0x98] sm:$0xf]
    %v619 = vld [vmem:[#allocation9 + $0x9c] sm:$0xf]
    %v620 = vld [vmem:[#allocation9 + $0xa0] sm:$0xf]
    %v621 = vld [vmem:[#allocation9 + $0xa4] sm:$0xf]
    %v622 = vld [vmem:[#allocation9 + $0xa8] sm:$0xf]
    %v623 = vld [vmem:[#allocation9 + $0xac] sm:$0xf]
    %v624 = vld [vmem:[#allocation9 + $0xb0] sm:$0xf]
    %v625 = vld [vmem:[#allocation9 + $0xb4] sm:$0xf]
    %v626 = vld [vmem:[#allocation9 + $0xb8] sm:$0xf]
    %v627 = vld [vmem:[#allocation9 + $0xbc] sm:$0xf]
    %v628 = vpack.c.b16 %v577, %v574
    %v629 = vpack.c.b16 %v578, %v575
    %v630 = vpack.c.b16 %v579, %v576
    %v682 = vunpack.c.l.b16 %v580
    %v683 = vunpack.c.l.b16 %v581
    %v684 = vunpack.c.l.b16 %v582
    %v685 = vunpack.c.l.b16 %v583
    %v686 = vunpack.c.l.b16 %v584
    %v687 = vunpack.c.l.b16 %v585
    %v688 = vunpack.c.l.b16 %v586
    %v689 = vunpack.c.l.b16 %v587
    %v690 = vunpack.c.l.b16 %v588
    %v691 = vunpack.c.l.b16 %v589
    %v692 = vunpack.c.l.b16 %v590
    %v693 = vunpack.c.l.b16 %v591
    %v694 = vunpack.c.l.b16 %v592
    %v695 = vunpack.c.l.b16 %v593
    %v696 = vunpack.c.l.b16 %v594
    %v697 = vunpack.c.l.b16 %v595
    %v698 = vunpack.c.l.b16 %v596
    %v699 = vunpack.c.l.b16 %v597
    %v700 = vunpack.c.l.b16 %v598
    %v701 = vunpack.c.l.b16 %v599
    %v702 = vunpack.c.l.b16 %v600
    %v703 = vunpack.c.l.b16 %v601
    %v704 = vunpack.c.l.b16 %v602
    %v705 = vunpack.c.l.b16 %v603
    %v706 = vunpack.c.l.b16 %v604
    %v707 = vunpack.c.l.b16 %v605
    %v708 = vunpack.c.l.b16 %v606
    %v709 = vunpack.c.l.b16 %v607
    %v710 = vunpack.c.l.b16 %v608
    %v711 = vunpack.c.l.b16 %v609
    %v712 = vunpack.c.l.b16 %v610
    %v713 = vunpack.c.l.b16 %v611
    %v714 = vunpack.c.l.b16 %v612
    %v715 = vunpack.c.l.b16 %v613
    %v716 = vunpack.c.l.b16 %v614
    %v717 = vunpack.c.l.b16 %v615
    %v718 = vunpack.c.l.b16 %v616
    %v719 = vunpack.c.l.b16 %v617
    %v720 = vunpack.c.l.b16 %v618
    %v721 = vunpack.c.l.b16 %v619
    %v722 = vunpack.c.l.b16 %v620
    %v723 = vunpack.c.l.b16 %v621
    %v724 = vunpack.c.l.b16 %v622
    %v725 = vunpack.c.l.b16 %v623
    %v726 = vunpack.c.l.b16 %v624
    %v727 = vunpack.c.l.b16 %v625
    %v728 = vunpack.c.l.b16 %v626
    %v729 = vunpack.c.l.b16 %v627
    %v730 = vpack.c.b16 %v683, %v682
    %v731 = vpack.c.b16 %v685, %v684
    %v732 = vpack.c.b16 %v687, %v686
    %v733 = vpack.c.b16 %v689, %v688
    %v734 = vpack.c.b16 %v691, %v690
    %v735 = vpack.c.b16 %v693, %v692
    %v736 = vpack.c.b16 %v695, %v694
    %v737 = vpack.c.b16 %v697, %v696
    %v738 = vpack.c.b16 %v699, %v698
    %v739 = vpack.c.b16 %v701, %v700
    %v740 = vpack.c.b16 %v703, %v702
    %v741 = vpack.c.b16 %v705, %v704
    %v742 = vpack.c.b16 %v707, %v706
    %v743 = vpack.c.b16 %v709, %v708
    %v744 = vpack.c.b16 %v711, %v710
    %v745 = vpack.c.b16 %v713, %v712
    %v746 = vpack.c.b16 %v715, %v714
    %v747 = vpack.c.b16 %v717, %v716
    %v748 = vpack.c.b16 %v719, %v718
    %v749 = vpack.c.b16 %v721, %v720
    %v750 = vpack.c.b16 %v723, %v722
    %v751 = vpack.c.b16 %v725, %v724
    %v752 = vpack.c.b16 %v727, %v726
    %v753 = vpack.c.b16 %v729, %v728
    %778 = vmatprep.subr.bf16.mxu0 0
    %779 = vmatpush1.bf16.msra.mxu0 %v730
    %780 = vmatprep.subr.bf16.mxu0 0
    %781 = vmatpush1.bf16.msra.mxu0 %v731
    %782 = vmatprep.subr.bf16.mxu0 0
    %783 = vmatpush1.bf16.msra.mxu0 %v732
    %784 = vmatprep.subr.bf16.mxu0 0
    %785 = vmatpush1.bf16.msra.mxu0 %v733
    %786 = vmatprep.subr.bf16.mxu0 0
    %787 = vmatpush1.bf16.msra.mxu0 %v734
    %788 = vmatprep.subr.bf16.mxu0 0
    %789 = vmatpush1.bf16.msra.mxu0 %v735
    %790 = vmatprep.subr.bf16.mxu0 0
    %791 = vmatpush1.bf16.msra.mxu0 %v736
    %792 = vmatprep.subr.bf16.mxu0 0
    %793 = vmatpush1.bf16.msra.mxu0 %v737
    %794 = vmatprep.subr.bf16.mxu0 0
    %795 = vmatpush1.bf16.msra.mxu0 %v738
    %796 = vmatprep.subr.bf16.mxu0 0
    %797 = vmatpush1.bf16.msra.mxu0 %v739
    %798 = vmatprep.subr.bf16.mxu0 0
    %799 = vmatpush1.bf16.msra.mxu0 %v740
    %800 = vmatprep.subr.bf16.mxu0 0
    %801 = vmatpush1.bf16.msra.mxu0 %v741
    %802 = vmatprep.subr.bf16.mxu0 0
    %803 = vmatpush1.bf16.msra.mxu0 %v742
    %804 = vmatprep.subr.bf16.mxu0 0
    %805 = vmatpush1.bf16.msra.mxu0 %v743
    %806 = vmatprep.subr.bf16.mxu0 0
    %807 = vmatpush1.bf16.msra.mxu0 %v744
    %808 = vmatprep.subr.bf16.mxu0 0
    %809 = vmatpush1.bf16.msra.mxu0 %v745
    %810 = vmatprep.mubr.bf16.mxu0 %v629
    %811 = vmatmul.mubr.bf16.gmra.mrb[0].mxu0 %v628
    %v812 = vpop.f32.mrb[0].mxu0
    %v813 = vadd.f32 0.0, %v812
    %v814 = vpop.f32.mrb[0].mxu0
    %v815 = vpop.f32.mrb[0].mxu0
    %v816 = vadd.f32 0.0, %v815
    %v817 = vpop.f32.mrb[0].mxu0
    %818 = vdwg.mxu0
    %819 = vmatprep.subr.bf16.mxu0 0
    %820 = vmatpush1.bf16.msra.mxu0 %v746
    %821 = vmatprep.subr.bf16.mxu0 0
    %822 = vmatpush1.bf16.msra.mxu0 %v747
    %823 = vmatprep.subr.bf16.mxu0 0
    %824 = vmatpush1.bf16.msra.mxu0 %v748
    %825 = vmatprep.subr.bf16.mxu0 0
    %826 = vmatpush1.bf16.msra.mxu0 %v749
    %827 = vmatprep.subr.bf16.mxu0 0
    %828 = vmatpush1.bf16.msra.mxu0 %v750
    %829 = vmatprep.subr.bf16.mxu0 0
    %830 = vmatpush1.bf16.msra.mxu0 %v751
    %831 = vmatprep.subr.bf16.mxu0 0
    %832 = vmatpush1.bf16.msra.mxu0 %v752
    %833 = vmatprep.subr.bf16.mxu0 0
    %834 = vmatpush1.bf16.msra.mxu0 %v753
    %835 = vmatprep.subr.bf16.mxu0 0
    %836 = vmatpush1.bf16.msra.mxu0 0
    %837 = vmatprep.subr.bf16.mxu0 0
    %838 = vmatpush1.bf16.msra.mxu0 0
    %839 = vmatprep.subr.bf16.mxu0 0
    %840 = vmatpush1.bf16.msra.mxu0 0
    %841 = vmatprep.subr.bf16.mxu0 0
    %842 = vmatpush1.bf16.msra.mxu0 0
    %843 = vmatprep.subr.bf16.mxu0 0
    %844 = vmatpush1.bf16.msra.mxu0 0
    %845 = vmatprep.subr.bf16.mxu0 0
    %846 = vmatpush1.bf16.msra.mxu0 0
    %847 = vmatprep.subr.bf16.mxu0 0
    %848 = vmatpush1.bf16.msra.mxu0 0
    %849 = vmatprep.subr.bf16.mxu0 0
    %850 = vmatpush1.bf16.msra.mxu0 0
    %851 = vmatprep.mubr.bf16.mxu0 0
    %852 = vmatmul.mubr.bf16.gmra.mrb[0].mxu0 %v630
    %v853 = vpop.f32.mrb[0].mxu0
    %v854 = vadd.f32 %v813, %v853
    %v855 = vpop.f32.mrb[0].mxu0
    %v856 = vpop.f32.mrb[0].mxu0
    %v857 = vadd.f32 %v816, %v856
    %v858 = vpop.f32.mrb[0].mxu0
    %859 = vdwg.mxu0
    %v860 = vld [vmem:[%s5] sm:$0x1]
    %v861 = vld [vmem:[%s6] sm:$0x1]
    %v862 = vadd.f32 %v854, %v857
    %v863 = vrot.slane %v862, 4
    %v864 = vadd.f32 %v862, %v863
    %v865 = vrot.slane %v864, 2
    %v866 = vadd.f32 %v864, %v865
    %v867 = vrot.slane %v866, 1
    %v868 = vadd.f32 %v866, %v867
    %v869 = vmul.f32 %v854, %v854
    %v870 = vmul.f32 %v857, %v857
    %v871 = vadd.f32 %v869, %v870
    %v872 = vrot.slane %v871, 4
    %v873 = vadd.f32 %v871, %v872
    %v874 = vrot.slane %v873, 2
    %v875 = vadd.f32 %v873, %v874
    %v876 = vrot.slane %v875, 1
    %v877 = vadd.f32 %v875, %v876
    %v878 = vsel %vm432, %v868, %v877
    %879 = vmatprep.subr.mxu0 0.0
    %880 = vmatpush1.msra.mxu0 %v88
    %881 = vmatprep.subr.mxu0 0.0
    %882 = vmatpush1.msra.mxu0 %v89
    %883 = vmatprep.subr.mxu0 0.0
    %884 = vmatpush1.msra.mxu0 %v90
    %885 = vmatprep.subr.mxu0 0.0
    %886 = vmatpush1.msra.mxu0 %v91
    %887 = vmatprep.subr.mxu0 0.0
    %888 = vmatpush1.msra.mxu0 %v92
    %889 = vmatprep.subr.mxu0 0.0
    %890 = vmatpush1.msra.mxu0 %v93
    %891 = vmatprep.subr.mxu0 0.0
    %892 = vmatpush1.msra.mxu0 %v94
    %893 = vmatprep.subr.mxu0 0.0
    %894 = vmatpush1.msra.mxu0 %v95
    %895 = vmatprep.subr.mxu0 0.0
    %896 = vmatpush1.msra.mxu0 %v96
    %897 = vmatprep.subr.mxu0 0.0
    %898 = vmatpush1.msra.mxu0 %v97
    %899 = vmatprep.subr.mxu0 0.0
    %900 = vmatpush1.msra.mxu0 %v98
    %901 = vmatprep.subr.mxu0 0.0
    %902 = vmatpush1.msra.mxu0 %v99
    %903 = vmatprep.subr.mxu0 0.0
    %904 = vmatpush1.msra.mxu0 %v100
    %905 = vmatprep.subr.mxu0 0.0
    %906 = vmatpush1.msra.mxu0 %v101
    %907 = vmatprep.subr.mxu0 0.0
    %908 = vmatpush1.msra.mxu0 %v102
    %909 = vmatprep.subr.mxu0 0.0
    %910 = vmatpush1.msra.mxu0 %v103
    %911 = vmatprep.subr.mxu0 0.0
    %912 = vmatpush1.msra.mxu0 0.0
    %913 = vmatprep.subr.mxu0 0.0
    %914 = vmatpush1.msra.mxu0 0.0
    %915 = vmatprep.subr.mxu0 0.0
    %916 = vmatpush1.msra.mxu0 0.0
    %917 = vmatprep.subr.mxu0 0.0
    %918 = vmatpush1.msra.mxu0 0.0
    %919 = vmatprep.subr.mxu0 0.0
    %920 = vmatpush1.msra.mxu0 0.0
    %921 = vmatprep.subr.mxu0 0.0
    %922 = vmatpush1.msra.mxu0 0.0
    %923 = vmatprep.subr.mxu0 0.0
    %924 = vmatpush1.msra.mxu0 0.0
    %925 = vmatprep.subr.mxu0 0.0
    %926 = vmatpush1.msra.mxu0 0.0
    %927 = vmatprep.subr.mxu0 0.0
    %928 = vmatpush1.msra.mxu0 0.0
    %929 = vmatprep.subr.mxu0 0.0
    %930 = vmatpush1.msra.mxu0 0.0
    %931 = vmatprep.subr.mxu0 0.0
    %932 = vmatpush1.msra.mxu0 0.0
    %933 = vmatprep.subr.mxu0 0.0
    %934 = vmatpush1.msra.mxu0 0.0
    %935 = vmatprep.subr.mxu0 0.0
    %936 = vmatpush1.msra.mxu0 0.0
    %937 = vmatprep.subr.mxu0 0.0
    %938 = vmatpush1.msra.mxu0 0.0
    %939 = vmatprep.subr.mxu0 0.0
    %940 = vmatpush1.msra.mxu0 0.0
    %941 = vmatprep.subr.mxu0 0.0
    %942 = vmatpush1.msra.mxu0 0.0
    %943 = vmatprep.mubr.f32.mxu0 0.0
    %944 = vmatmul.mubr.f32.gmra.mrb[0].mxu0 %v878
    %v945 = vpop.f32.mrb[0].mxu0
    %v946 = vadd.f32 0.0, %v945
    %v947 = vpop.f32.mrb[0].mxu0
    %948 = vdwg.mxu0
    %v949 = vmul.f32 %v946, %v946
    %v951 = vrot.slane %v949, 7
    %v953 = vsub.f32 %v946, %v951
    %v954 = vmax.f32 %v953, 0.0
    %v955 = vadd.f32 %v954, 1e-05
    %v956 = vrsqrt.pop %v955
    %v959 = vunpack.c.l.s4 1966171168
    %v960 = vunpack.c.0.s8 %v959
    %v961 = vlaneseq
    %v962 = vshrl.u32 %v961, 7
    %v963 = vsub.s32 %v960, %v962
    %v964 = vrot.slane %v956, %v963
    %v965 = vcombine.high %v964, %v964
    %v967 = vunpack.c.l.s4 1966171168
    %v968 = vunpack.c.0.s8 %v967
    %v969 = vlaneseq
    %v970 = vshrl.u32 %v969, 7
    %v971 = vsub.s32 %v968, %v970
    %v972 = vrot.slane %v965, %v971
    %v974 = vmul.f32 %v860, %v972
    %v975 = vmul.f32 %v946, %v974
    %v976 = vsub.f32 %v861, %v975
    %v978 = vlaneseq
    %v979 = vshrl.u32 %v978, 7
    %v980 = vsub.s32 0, %v979
    %v981 = vrot.slane %v974, %v980
    %v983 = vmul.f32 %v854, %v981
    %v984 = vmul.f32 %v857, %v981
    %v986 = vlaneseq
    %v987 = vshrl.u32 %v986, 7
    %v988 = vsub.s32 0, %v987
    %v989 = vrot.slane %v976, %v988
    %v991 = vadd.f32 %v983, %v989
    %v992 = vadd.f32 %v984, %v989
    %v993 = vadd.f32 %v991, %v86
    %v994 = vadd.f32 %v992, %v87
    %v995 = vmax.f32 %v993, 0.0
    %v996 = vmax.f32 %v994, 0.0
    %997 = vst [vmem:[#allocation12] sm:$0xff] %v995
    %998 = vst [vmem:[#allocation12 + $0x8] sm:$0xff] %v996
    // Predicated region
    $region50: #{basic_block_forward_lane.1} parent=1 // pred_check
      _
    $region51: #{basic_block_forward_lane.1} parent=1 // pred_check_branch
      %1000 = sbr.rel (0) target = $region53
    $region52: #{basic_block_forward_lane.1} parent=1 // pred_region
      %s1002 = ssub.s32 256, 256
      %1003 = vsyncadd [#allocation6], %s1002
      %s1004 = sshll.u32 [#allocation12], 4
      %s1005 = int_to_ptr.vmem [resolvable:$true] %s1004
      %1010 = dma.vmem_to_hbm [thread:$0]  %s1005, 256, %s8, [#allocation6], 128, 128, 8
    $region53: #{basic_block_forward_lane.1} parent=1 // pred_fallthru
      _
    // Predicated region
    $region54: #{basic_block_forward_lane.1} parent=1 // pred_check
      _
    $region55: #{basic_block_forward_lane.1} parent=1 // pred_check_branch
      %1012 = sbr.rel (0) target = $region57
    $region56: #{basic_block_forward_lane.1} parent=1 // pred_region
      %1013 = dma.done [#allocation6], 256
    $region57: #{basic_block_forward_lane.1} parent=1 // pred_fallthru
      _
    %1014 = vsyncpa [#allocation5], 1
    %1015 = vsyncpa [#allocation8], 1
    %1016 = vsyncpa [#allocation11], 1
    %1017 = vsyncpa [#allocation6], 1

</llo_original>
